<compile_context>
chip_gen: v5e
topology: v5e:2x2
jax: 0.10.0
libtpu: 0.0.40
codegen_flags: <defaults>
</compile_context>

<pallas_src>
import functools

import jax
import jax.numpy as jnp
from jax.experimental import pallas as pl
from jax.experimental.pallas import tpu as pltpu


# ----------------------------- layout helpers --------------------------------

def _to_node_major(x_bnd):
    """(Bblk, N, D) batch-major tile -> (N*Bblk, D) node-major 2-D."""
    b, n, d = x_bnd.shape
    if b == 1:
        return x_bnd.reshape(n, d)
    return jnp.transpose(x_bnd, (1, 0, 2)).reshape(n * b, d)


def _to_batch_major(x_2d, b, n):
    """(N*Bblk, D) node-major -> (Bblk, N, D) batch-major for the store."""
    d = x_2d.shape[-1]
    if b == 1:
        return x_2d.reshape(1, n, d)
    return jnp.transpose(x_2d.reshape(n, b, d), (1, 0, 2))


# ------------------------------ fused kernel ---------------------------------

def _fused_gnn_decoder_kernel(x_ref, adj_ref, *refs, num_gnn_layers,
                              has_downsample, gnn_res, compute_dtype):
    """refs = [w0, b0, w1, b1, ..., o_ref].

    Weights and adj are pre-cast to `compute_dtype` by the wrapper; biases stay
    float32 as (1, Dout) refs.  All matmuls accumulate in float32 on the MXU.
    Activations are node-major 2-D (N*Bblk, D); the adjacency matmul uses the
    contiguous (N, Bblk*D) view so the batch fills the MXU columns.
    """
    o_ref = refs[-1]
    wb = refs[:-1]

    bblk, n, _ = x_ref.shape
    adj = adj_ref[...]                          # (N, N), compute_dtype, resident

    x2d = _to_node_major(x_ref[...])            # (N*Bblk, Din), f32
    h = x2d.astype(compute_dtype)

    idx = 0
    if has_downsample:
        w_ref, b_ref = wb[0], wb[1]
        idx = 2
        acc = jnp.dot(h, w_ref[...],
                      preferred_element_type=jnp.float32) + b_ref[...]
        origin = acc                            # f32 residual (Linear, no act)
        h = acc.astype(compute_dtype)
    else:
        origin = x2d                            # f32 residual == x exactly

    h_f32 = origin
    for layer in range(num_gnn_layers):
        w_ref = wb[idx + 2 * layer]
        b_ref = wb[idx + 2 * layer + 1]
        din, dout = w_ref.shape
        if dout <= din:
            # x@W first: shrinks the operand fed to the NxN adjacency matmul.
            t = jnp.dot(h, w_ref[...], preferred_element_type=jnp.float32)
            t = t.astype(compute_dtype).reshape(n, bblk * dout)   # lane-packed
            acc = jnp.dot(adj, t, preferred_element_type=jnp.float32)
            acc = acc.reshape(n * bblk, dout)
        else:
            t = jnp.dot(adj, h.reshape(n, bblk * din),
                        preferred_element_type=jnp.float32)
            t = t.astype(compute_dtype).reshape(n * bblk, din)
            acc = jnp.dot(t, w_ref[...], preferred_element_type=jnp.float32)
        h_f32 = jnp.maximum(acc + b_ref[...], 0.0)   # f32 epilogue on the VPU
        h = h_f32.astype(compute_dtype)              # single cast per layer

    # Direct slice stores (no in-kernel lane concat).
    out_dim = wb[-2].shape[1]
    if gnn_res:
        o_ref[:, :, :out_dim] = _to_batch_major(h_f32, bblk, n).astype(o_ref.dtype)
        o_ref[:, :, out_dim:] = _to_batch_major(origin, bblk, n).astype(o_ref.dtype)
    else:
        o_ref[...] = _to_batch_major(h_f32, bblk, n).astype(o_ref.dtype)


# --------------------------------- wrapper ------------------------------------

def _pick_batch_block(B, N, target_rows=256):
    """Batches folded per grid step: fill the MXU M dimension (~128/256 rows)
    while keeping >=2 grid steps when B allows (feeds both v7x TensorCores)."""
    bblk = max(1, min(B, max(1, target_rows // max(N, 1))))
    if B >= 2:
        bblk = max(1, min(bblk, B // 2))
    while B % bblk:          # keep blocks evenly divisible (no ragged tiles)
        bblk -= 1
    return bblk


def gnn_decoder_forward(adj, x, params, args, compute_dtype=jnp.bfloat16):
    """Fused GNNDecoder forward.  x: (B, N, in_dim); adj: (N, N) or None.

    compute_dtype=bf16 is the recommended MXU-operand path on v5e/v6e/v7x;
    accumulation, bias+ReLU and the residual stay float32.
    """
    B, N, in_dim = x.shape
    if adj is None:
        adj = params["adj_w"]
    has_downsample = params["downsample_w"] is not None

    wb = []
    if has_downsample:
        wb += [params["downsample_w"].astype(compute_dtype),
               params["downsample_b"].reshape(1, -1).astype(jnp.float32)]
    for (w, b) in params["gnn_layers"]:
        wb += [w.astype(compute_dtype), b.reshape(1, -1).astype(jnp.float32)]

    out_dim = params["gnn_layers"][-1][0].shape[1]
    gnn_in_dim = params["downsample_w"].shape[1] if has_downsample else in_dim
    d_tot = out_dim + (gnn_in_dim if args["gnn_res"] else 0)

    bblk = _pick_batch_block(B, N)
    grid = (B // bblk,)

    # Advisory cost estimate so XLA schedules the surrounding graph sensibly.
    flops = 2 * B * N * in_dim * gnn_in_dim if has_downsample else 0
    for (w, _) in params["gnn_layers"]:
        din, dout = w.shape
        flops += 2 * B * N * din * dout            # x @ W
        flops += 2 * B * N * N * min(din, dout)    # adj @ (.)
    bytes_accessed = int(
        x.size * x.dtype.itemsize
        + adj.size * jnp.dtype(compute_dtype).itemsize
        + sum(a.size * a.dtype.itemsize for a in wb)
        + B * N * d_tot * 4)

    kernel = functools.partial(
        _fused_gnn_decoder_kernel,
        num_gnn_layers=len(params["gnn_layers"]),
        has_downsample=has_downsample,
        gnn_res=args["gnn_res"],
        compute_dtype=compute_dtype)

    in_specs = [
        pl.BlockSpec((bblk, N, in_dim), lambda i: (i, 0, 0)),   # batch tile
        pl.BlockSpec((N, N), lambda i: (0, 0)),                 # adj, resident
    ]
    # Constant index_maps -> adj / weights / biases stay VMEM-resident across
    # grid steps (no re-DMA).  For very large N see the header TODO about
    # bf16 row-tiled adj + single-buffered constants.
    in_specs += [pl.BlockSpec(a.shape, lambda i: (0, 0)) for a in wb]

    return pl.pallas_call(
        kernel,
        out_shape=jax.ShapeDtypeStruct((B, N, d_tot), jnp.float32),
        grid=grid,
        in_specs=in_specs,
        out_specs=pl.BlockSpec((bblk, N, d_tot), lambda i: (i, 0, 0)),
        compiler_params=pltpu.CompilerParams(
            dimension_semantics=("parallel",),
            vmem_limit_bytes=64 * 1024 * 1024),
        cost_estimate=pl.CostEstimate(
            flops=int(flops), transcendentals=0,
            bytes_accessed=bytes_accessed),
    )(x, adj.astype(compute_dtype), *wb)


# ------------------------------ parameter init --------------------------------

def kaiming_normal(key, shape, fan_in):
    std = (2.0 / fan_in) ** 0.5
    return std * jax.random.normal(key, shape, dtype=jnp.float32)


def init_params(key, N, in_dim, out_dim, args):
    ks = list(jax.random.split(key, 16))
    params = {}
    if args["gnn_downsample_dim"] > 0:
        d = args["gnn_downsample_dim"]
        params["downsample_w"] = kaiming_normal(ks.pop(), (in_dim, d), in_dim)
        params["downsample_b"] = jnp.zeros((d,), jnp.float32)
        gnn_in = d
    else:
        params["downsample_w"] = None
        params["downsample_b"] = None
        gnn_in = in_dim
    dims = ([gnn_in] + [args["gnn_hid_dim"]] * (args["gnn_layer_num"] - 1)
            + [out_dim])
    layers = []
    for di, do in zip(dims[:-1], dims[1:]):
        layers.append((kaiming_normal(ks.pop(), (di, do), di),
                       jnp.zeros((do,), jnp.float32)))
    params["gnn_layers"] = layers
    params["adj_w"] = kaiming_normal(ks.pop(), (N, N), N)
    return params


# ------------------------------- pure-JAX ref ----------------------------------

def gnn_decoder_reference(adj, x, params, args, compute_dtype=jnp.float32):
    """Pure-JAX reference mirroring the kernel's cast points / matmul order."""
    f32 = jnp.float32

    def rnd(a):  # round operands like the kernel does, accumulate in f32
        return a.astype(compute_dtype).astype(f32)

    if adj is None:
        adj = params["adj_w"]
    adj = rnd(adj)
    h = x.astype(f32)
    if params["downsample_w"] is not None:
        h = jnp.einsum("bnd,de->bne", rnd(h), rnd(params["downsample_w"])) \
            + params["downsample_b"]
    origin = h
    for (w, b) in params["gnn_layers"]:
        din, dout = w.shape
        if dout <= din:
            t = jnp.einsum("bnd,de->bne", rnd(h), rnd(w))
            h = jnp.einsum("nm,bme->bne", adj, rnd(t))
        else:
            t = jnp.einsum("nm,bmd->bnd", adj, rnd(h))
            h = jnp.einsum("bnd,de->bne", rnd(t), rnd(w))
        h = jnp.maximum(h + b, 0.0)
    if args["gnn_res"]:
        h = jnp.concatenate([h, origin], axis=-1)
    return h


# ----------------------------------- main ---------------------------------------

if __name__ == "__main__":
    args = dict(
        gnn_downsample_dim=16,
        gnn_hid_dim=32,
        gnn_layer_num=3,
        gnn_pooling="none",
        gnn_res=True,
        dropout=0.0,
    )
    B, N, in_dim, out_dim = 2, 8, 32, 16

    key = jax.random.PRNGKey(0)
    kx, kp, kp2 = jax.random.split(key, 3)
    x = jax.random.normal(kx, (B, N, in_dim), dtype=jnp.float32)
    params = init_params(kp, N, in_dim, out_dim, args)

    # f32 operand path (tight check); adj=None -> learned adj_w fallback.
    out = jax.block_until_ready(
        gnn_decoder_forward(None, x, params, args, compute_dtype=jnp.float32))
    ref = gnn_decoder_reference(None, x, params, args, compute_dtype=jnp.float32)
    assert out.shape == (B, N, out_dim + args["gnn_downsample_dim"]), out.shape
    assert jnp.allclose(out, ref, atol=1e-3, rtol=1e-3), \
        float(jnp.max(jnp.abs(out - ref)))

    # bf16 operand path (recommended on v5e AND v6e/v7x); f32 accumulation.
    out_bf16 = jax.block_until_ready(
        gnn_decoder_forward(None, x, params, args, compute_dtype=jnp.bfloat16))
    ref_bf16 = gnn_decoder_reference(None, x, params, args,
                                     compute_dtype=jnp.bfloat16)
    assert jnp.allclose(out_bf16, ref_bf16, atol=5e-2, rtol=5e-2), \
        float(jnp.max(jnp.abs(out_bf16 - ref_bf16)))

    # No-downsample / no-residual config with an explicit adjacency input.
    args2 = dict(gnn_downsample_dim=0, gnn_hid_dim=32, gnn_layer_num=3,
                 gnn_pooling="none", gnn_res=False, dropout=0.0)
    params2 = init_params(kp2, N, in_dim, out_dim, args2)
    adj_in = jax.random.normal(jax.random.PRNGKey(1), (N, N), dtype=jnp.float32)
    out2 = jax.block_until_ready(
        gnn_decoder_forward(adj_in, x, params2, args2,
                            compute_dtype=jnp.float32))
    ref2 = gnn_decoder_reference(adj_in, x, params2, args2,
                                 compute_dtype=jnp.float32)
    assert out2.shape == (B, N, out_dim), out2.shape
    assert jnp.allclose(out2, ref2, atol=1e-3, rtol=1e-3), \
        float(jnp.max(jnp.abs(out2 - ref2)))

    print("KERNEL_OK")
</pallas_src>

<mosaic_0001>
module attributes {stable_mosaic.version = 11 : i64} {
  func.func @_fused_gnn_decoder_kernel(%arg0: i32, %arg1: memref<1x8x32xf32, #tpu.memory_space<vmem>>, %arg2: memref<8x8xf32, #tpu.memory_space<vmem>>, %arg3: memref<32x16xf32, #tpu.memory_space<vmem>>, %arg4: memref<1x16xf32, #tpu.memory_space<vmem>>, %arg5: memref<16x32xf32, #tpu.memory_space<vmem>>, %arg6: memref<1x32xf32, #tpu.memory_space<vmem>>, %arg7: memref<32x32xf32, #tpu.memory_space<vmem>>, %arg8: memref<1x32xf32, #tpu.memory_space<vmem>>, %arg9: memref<32x16xf32, #tpu.memory_space<vmem>>, %arg10: memref<1x16xf32, #tpu.memory_space<vmem>>, %arg11: memref<1x8x32xf32, #tpu.memory_space<vmem>>) attributes {dimension_semantics = [#tpu.dimension_semantics<parallel>], iteration_bounds = array<i64: 2>, scalar_prefetch = 0 : i64, scratch_operands = 0 : i64, tpu.core_type = #tpu.core_type<tc>, window_params = [{transform_indices = @transform_0, window_bounds = array<i64: 1, 8, 32>}, {pipeline_mode = #tpu.pipeline_mode<synchronous>, transform_indices = @transform_1, window_bounds = array<i64: 8, 8>}, {pipeline_mode = #tpu.pipeline_mode<synchronous>, transform_indices = @transform_2, window_bounds = array<i64: 32, 16>}, {pipeline_mode = #tpu.pipeline_mode<synchronous>, transform_indices = @transform_3, window_bounds = array<i64: 1, 16>}, {pipeline_mode = #tpu.pipeline_mode<synchronous>, transform_indices = @transform_4, window_bounds = array<i64: 16, 32>}, {pipeline_mode = #tpu.pipeline_mode<synchronous>, transform_indices = @transform_5, window_bounds = array<i64: 1, 32>}, {pipeline_mode = #tpu.pipeline_mode<synchronous>, transform_indices = @transform_6, window_bounds = array<i64: 32, 32>}, {pipeline_mode = #tpu.pipeline_mode<synchronous>, transform_indices = @transform_7, window_bounds = array<i64: 1, 32>}, {pipeline_mode = #tpu.pipeline_mode<synchronous>, transform_indices = @transform_8, window_bounds = array<i64: 32, 16>}, {pipeline_mode = #tpu.pipeline_mode<synchronous>, transform_indices = @transform_9, window_bounds = array<i64: 1, 16>}, {transform_indices = @transform_10, window_bounds = array<i64: 1, 8, 32>}]} {
    %c0 = arith.constant 0 : index
    %c0_0 = arith.constant 0 : index
    %0 = vector.load %arg2[%c0, %c0_0] : memref<8x8xf32, #tpu.memory_space<vmem>>, vector<8x8xf32>
    %c0_1 = arith.constant 0 : index
    %c0_2 = arith.constant 0 : index
    %c0_3 = arith.constant 0 : index
    %1 = vector.load %arg1[%c0_1, %c0_2, %c0_3] : memref<1x8x32xf32, #tpu.memory_space<vmem>>, vector<1x8x32xf32>
    %2 = vector.shape_cast %1 : vector<1x8x32xf32> to vector<8x32xf32>
    %c0_4 = arith.constant 0 : index
    %c0_5 = arith.constant 0 : index
    %3 = vector.load %arg3[%c0_4, %c0_5] : memref<32x16xf32, #tpu.memory_space<vmem>>, vector<32x16xf32>
    %cst = arith.constant dense<0.000000e+00> : vector<8x16xf32>
    %4 = tpu.matmul %2, %3, %cst {dimension_numbers = #tpu.dot_dimension_numbers<[1], [0], [0], [1], [0, 0, 1, 1], [], []>} : vector<8x32xf32>, vector<32x16xf32>, vector<8x16xf32> -> vector<8x16xf32>
    %c0_6 = arith.constant 0 : index
    %c0_7 = arith.constant 0 : index
    %5 = vector.load %arg4[%c0_6, %c0_7] : memref<1x16xf32, #tpu.memory_space<vmem>>, vector<1x16xf32>
    %6 = vector.broadcast %5 : vector<1x16xf32> to vector<8x16xf32>
    %7 = arith.addf %4, %6 : vector<8x16xf32>
    %cst_8 = arith.constant dense<0.000000e+00> : vector<8x16xf32>
    %8 = tpu.matmul %0, %7, %cst_8 {dimension_numbers = #tpu.dot_dimension_numbers<[1], [0], [0], [1], [0, 0, 1, 1], [], []>} : vector<8x8xf32>, vector<8x16xf32>, vector<8x16xf32> -> vector<8x16xf32>
    %c0_9 = arith.constant 0 : index
    %c0_10 = arith.constant 0 : index
    %9 = vector.load %arg5[%c0_9, %c0_10] : memref<16x32xf32, #tpu.memory_space<vmem>>, vector<16x32xf32>
    %cst_11 = arith.constant dense<0.000000e+00> : vector<8x32xf32>
    %10 = tpu.matmul %8, %9, %cst_11 {dimension_numbers = #tpu.dot_dimension_numbers<[1], [0], [0], [1], [0, 0, 1, 1], [], []>} : vector<8x16xf32>, vector<16x32xf32>, vector<8x32xf32> -> vector<8x32xf32>
    %c0_12 = arith.constant 0 : index
    %c0_13 = arith.constant 0 : index
    %11 = vector.load %arg6[%c0_12, %c0_13] : memref<1x32xf32, #tpu.memory_space<vmem>>, vector<1x32xf32>
    %12 = vector.broadcast %11 : vector<1x32xf32> to vector<8x32xf32>
    %13 = arith.addf %10, %12 : vector<8x32xf32>
    %cst_14 = arith.constant 0.000000e+00 : f32
    %14 = vector.broadcast %cst_14 : f32 to vector<8x32xf32>
    %15 = arith.maximumf %13, %14 : vector<8x32xf32>
    %c0_15 = arith.constant 0 : index
    %c0_16 = arith.constant 0 : index
    %16 = vector.load %arg7[%c0_15, %c0_16] : memref<32x32xf32, #tpu.memory_space<vmem>>, vector<32x32xf32>
    %cst_17 = arith.constant dense<0.000000e+00> : vector<8x32xf32>
    %17 = tpu.matmul %15, %16, %cst_17 {dimension_numbers = #tpu.dot_dimension_numbers<[1], [0], [0], [1], [0, 0, 1, 1], [], []>} : vector<8x32xf32>, vector<32x32xf32>, vector<8x32xf32> -> vector<8x32xf32>
    %cst_18 = arith.constant dense<0.000000e+00> : vector<8x32xf32>
    %18 = tpu.matmul %0, %17, %cst_18 {dimension_numbers = #tpu.dot_dimension_numbers<[1], [0], [0], [1], [0, 0, 1, 1], [], []>} : vector<8x8xf32>, vector<8x32xf32>, vector<8x32xf32> -> vector<8x32xf32>
    %c0_19 = arith.constant 0 : index
    %c0_20 = arith.constant 0 : index
    %19 = vector.load %arg8[%c0_19, %c0_20] : memref<1x32xf32, #tpu.memory_space<vmem>>, vector<1x32xf32>
    %20 = vector.broadcast %19 : vector<1x32xf32> to vector<8x32xf32>
    %21 = arith.addf %18, %20 : vector<8x32xf32>
    %cst_21 = arith.constant 0.000000e+00 : f32
    %22 = vector.broadcast %cst_21 : f32 to vector<8x32xf32>
    %23 = arith.maximumf %21, %22 : vector<8x32xf32>
    %c0_22 = arith.constant 0 : index
    %c0_23 = arith.constant 0 : index
    %24 = vector.load %arg9[%c0_22, %c0_23] : memref<32x16xf32, #tpu.memory_space<vmem>>, vector<32x16xf32>
    %cst_24 = arith.constant dense<0.000000e+00> : vector<8x16xf32>
    %25 = tpu.matmul %23, %24, %cst_24 {dimension_numbers = #tpu.dot_dimension_numbers<[1], [0], [0], [1], [0, 0, 1, 1], [], []>} : vector<8x32xf32>, vector<32x16xf32>, vector<8x16xf32> -> vector<8x16xf32>
    %cst_25 = arith.constant dense<0.000000e+00> : vector<8x16xf32>
    %26 = tpu.matmul %0, %25, %cst_25 {dimension_numbers = #tpu.dot_dimension_numbers<[1], [0], [0], [1], [0, 0, 1, 1], [], []>} : vector<8x8xf32>, vector<8x16xf32>, vector<8x16xf32> -> vector<8x16xf32>
    %c0_26 = arith.constant 0 : index
    %c0_27 = arith.constant 0 : index
    %27 = vector.load %arg10[%c0_26, %c0_27] : memref<1x16xf32, #tpu.memory_space<vmem>>, vector<1x16xf32>
    %28 = vector.broadcast %27 : vector<1x16xf32> to vector<8x16xf32>
    %29 = arith.addf %26, %28 : vector<8x16xf32>
    %cst_28 = arith.constant 0.000000e+00 : f32
    %30 = vector.broadcast %cst_28 : f32 to vector<8x16xf32>
    %31 = arith.maximumf %29, %30 : vector<8x16xf32>
    %32 = vector.shape_cast %31 : vector<8x16xf32> to vector<1x8x16xf32>
    %c0_29 = arith.constant 0 : index
    %c0_30 = arith.constant 0 : index
    %c0_31 = arith.constant 0 : index
    %33 = vector.load %arg11[%c0_29, %c0_30, %c0_31] : memref<1x8x32xf32, #tpu.memory_space<vmem>>, vector<1x8x16xf32>
    tpu.vector_store %arg11[%c0_29, %c0_30, %c0_31], %32 {strides = array<i32>} : memref<1x8x32xf32, #tpu.memory_space<vmem>>, vector<1x8x16xf32>,
    %34 = vector.shape_cast %7 : vector<8x16xf32> to vector<1x8x16xf32>
    %c0_32 = arith.constant 0 : index
    %c0_33 = arith.constant 0 : index
    %c16 = arith.constant 16 : index
    %35 = vector.load %arg11[%c0_32, %c0_33, %c16] : memref<1x8x32xf32, #tpu.memory_space<vmem>>, vector<1x8x16xf32>
    tpu.vector_store %arg11[%c0_32, %c0_33, %c16], %34 {strides = array<i32>} : memref<1x8x32xf32, #tpu.memory_space<vmem>>, vector<1x8x16xf32>,
    return
  }
  func.func @transform_0(%arg0: i32) -> (i32, i32, i32) {
    %c0_i32 = arith.constant 0 : i32
    %c0_i32_0 = arith.constant 0 : i32
    %c0_i32_1 = arith.constant 0 : i32
    return %arg0, %c0_i32, %c0_i32_0 : i32, i32, i32
  }
  func.func @transform_1(%arg0: i32) -> (i32, i32) {
    %c0_i32 = arith.constant 0 : i32
    %c0_i32_0 = arith.constant 0 : i32
    %c0_i32_1 = arith.constant 0 : i32
    return %c0_i32, %c0_i32_0 : i32, i32
  }
  func.func @transform_2(%arg0: i32) -> (i32, i32) {
    %c0_i32 = arith.constant 0 : i32
    %c0_i32_0 = arith.constant 0 : i32
    %c0_i32_1 = arith.constant 0 : i32
    return %c0_i32, %c0_i32_0 : i32, i32
  }
  func.func @transform_3(%arg0: i32) -> (i32, i32) {
    %c0_i32 = arith.constant 0 : i32
    %c0_i32_0 = arith.constant 0 : i32
    %c0_i32_1 = arith.constant 0 : i32
    return %c0_i32, %c0_i32_0 : i32, i32
  }
  func.func @transform_4(%arg0: i32) -> (i32, i32) {
    %c0_i32 = arith.constant 0 : i32
    %c0_i32_0 = arith.constant 0 : i32
    %c0_i32_1 = arith.constant 0 : i32
    return %c0_i32, %c0_i32_0 : i32, i32
  }
  func.func @transform_5(%arg0: i32) -> (i32, i32) {
    %c0_i32 = arith.constant 0 : i32
    %c0_i32_0 = arith.constant 0 : i32
    %c0_i32_1 = arith.constant 0 : i32
    return %c0_i32, %c0_i32_0 : i32, i32
  }
  func.func @transform_6(%arg0: i32) -> (i32, i32) {
    %c0_i32 = arith.constant 0 : i32
    %c0_i32_0 = arith.constant 0 : i32
    %c0_i32_1 = arith.constant 0 : i32
    return %c0_i32, %c0_i32_0 : i32, i32
  }
  func.func @transform_7(%arg0: i32) -> (i32, i32) {
    %c0_i32 = arith.constant 0 : i32
    %c0_i32_0 = arith.constant 0 : i32
    %c0_i32_1 = arith.constant 0 : i32
    return %c0_i32, %c0_i32_0 : i32, i32
  }
  func.func @transform_8(%arg0: i32) -> (i32, i32) {
    %c0_i32 = arith.constant 0 : i32
    %c0_i32_0 = arith.constant 0 : i32
    %c0_i32_1 = arith.constant 0 : i32
    return %c0_i32, %c0_i32_0 : i32, i32
  }
  func.func @transform_9(%arg0: i32) -> (i32, i32) {
    %c0_i32 = arith.constant 0 : i32
    %c0_i32_0 = arith.constant 0 : i32
    %c0_i32_1 = arith.constant 0 : i32
    return %c0_i32, %c0_i32_0 : i32, i32
  }
  func.func @transform_10(%arg0: i32) -> (i32, i32, i32) {
    %c0_i32 = arith.constant 0 : i32
    %c0_i32_0 = arith.constant 0 : i32
    %c0_i32_1 = arith.constant 0 : i32
    return %arg0, %c0_i32, %c0_i32_0 : i32, i32, i32
  }
}

</mosaic_0001>

<llo_original>
// kernel: tpu_custom_call.1
$region0: #{tpu_custom_call.1}
  #allocation0 [shape = 'u32[]', space=smem, size = 0x4, offset = 0x4, fixed_abs, tag = 'smem constant byte address 0x4 - core index']
  #allocation1 [shape = 'u32[72,128]{1,0:T(1,128)}', space=vmem, size = 0x9000, scoped, tag = 'internal scratch']
  %s0 = inlined_call_operand.vmem [shape: f32[2,8,32], index: 0, kind: input, shape index: {}]
  %s1 = inlined_call_operand.vmem [shape: f32[8,8], index: 1, kind: input, shape index: {}]
  %s2 = inlined_call_operand.vmem [shape: f32[32,16], index: 2, kind: input, shape index: {}]
  %s3 = inlined_call_operand.vmem [shape: f32[1,16], index: 3, kind: input, shape index: {}]
  %s4 = inlined_call_operand.vmem [shape: f32[16,32], index: 4, kind: input, shape index: {}]
  %s5 = inlined_call_operand.vmem [shape: f32[1,32], index: 5, kind: input, shape index: {}]
  %s6 = inlined_call_operand.vmem [shape: f32[32,32], index: 6, kind: input, shape index: {}]
  %s7 = inlined_call_operand.vmem [shape: f32[1,32], index: 7, kind: input, shape index: {}]
  %s8 = inlined_call_operand.vmem [shape: f32[32,16], index: 8, kind: input, shape index: {}]
  %s9 = inlined_call_operand.vmem [shape: f32[1,16], index: 9, kind: input, shape index: {}]
  %s10 = inlined_call_operand.hbm [shape: f32[2,8,32], index: 10, kind: output, shape index: {}]
  %s11 = sld [smem:[#allocation0]]
  $region73: #{tpu_custom_call.1} parent=0
    _
  %s13 = ssub.s32 1, %s11
  %s14 = scalar_select 0, %s13, %s11
  $region1: #{tpu_custom_call.1} parent=0
    #allocation2 [shape = 'u8[8192]{0}', space=vmem, size = 0x2000, scoped, tag = 'output window, operand 0']
    #allocation3 [shape = 's32[2]{0}', space=sflag, size = 0x8, scoped, tag = 'scoped memory for tpu_custom_call.1']
    %15 = vsyncpa [#allocation3], 0
    %s16 = scalar_lea.sflag [#allocation3], 1
    %17 = vsyncpa %s16, 0
    loop: start=0, step=1, limit=4
    $region2: #{tpu_custom_call.1} parent=1 // loop_pre_header
      _
    $region3: #{tpu_custom_call.1} parent=1 // loop_header
      %s19 = sphi 0, %s23
      %p20 = scmp.ge.s32.totalorder %s19, 4
      %s29 = sphi 0, %s31
      %s32 = sphi 0, %s29
      %s33 = sphi 0, %s32
      %s49 = sphi 0, %s33
      %s53 = sphi 0, %s53
      %s55 = sphi 0, %s53
      %s56 = sphi 0, %s55
      %s70 = sphi 0, %s56
      %s74 = sphi 0, %s74
      %s76 = sphi 0, %s74
      %s77 = sphi 0, %s76
      %s91 = sphi 0, %s77
      %s95 = sphi 0, %s95
      %s97 = sphi 0, %s95
      %s98 = sphi 0, %s97
      %s112 = sphi 0, %s98
      %s116 = sphi 0, %s116
      %s118 = sphi 0, %s116
      %s119 = sphi 0, %s118
      %s133 = sphi 0, %s119
      %s137 = sphi 0, %s137
      %s139 = sphi 0, %s137
      %s140 = sphi 0, %s139
      %s154 = sphi 0, %s140
      %s158 = sphi 0, %s158
      %s160 = sphi 0, %s158
      %s161 = sphi 0, %s160
      %s175 = sphi 0, %s161
      %s179 = sphi 0, %s179
      %s181 = sphi 0, %s179
      %s182 = sphi 0, %s181
      %s196 = sphi 0, %s182
      %s200 = sphi 0, %s200
      %s202 = sphi 0, %s200
      %s203 = sphi 0, %s202
      %s217 = sphi 0, %s203
      %s221 = sphi 0, %s221
      %s223 = sphi 0, %s221
      %s224 = sphi 0, %s223
      %s238 = sphi 0, %s224
      %s244 = sphi 0, %s246
      %s247 = sphi 0, %s244
      %s248 = sphi 0, %s247
      %s264 = sphi 0, %s248
    $region4: #{tpu_custom_call.1} parent=1 // loop_header_branch
      %22 = sbr.rel (%p20) target = $region8
    $region5: #{tpu_custom_call.1} parent=1 // loop_body
      %s24 = ssub.s32 %s19, 1
      %s25 = ssub.s32 %s19, 2
      %s26 = sadd.s32 %s19, 1
      %s27 = ssub.s32 %s19, %s26
      %p28 = scmp.eq.s32.totalorder %s27, 0
      %s30 = sadd.s32 %s29, 1
      %s31 = scalar_select %p28, %s29, %s30
      %p34 = pneg %p28
      %p35 = scmp.eq.s32.totalorder %s19, 1
      %p36 = por %p34, %p35
      %p37 = scmp.ne.s32.totalorder %s29, %s32
      %p38 = scmp.eq.s32.totalorder %s19, 0
      %p39 = por %p37, %p38
      %p40 = scmp.ne.s32.totalorder %s29, %s32
      %p41 = scmp.eq.s32.totalorder %s24, 1
      %p42 = por %p40, %p41
      %p43 = scmp.ne.s32.totalorder %s32, %s33
      %p44 = scmp.eq.s32.totalorder %s24, 0
      %p45 = por %p43, %p44
      %p46 = scmp.ne.s32.totalorder %s32, %s33
      %p47 = scmp.eq.s32.totalorder %s25, 1
      %p48 = por %p46, %p47
      %p50 = scmp.ne.s32.totalorder %s33, %s49
      %p51 = scmp.eq.s32.totalorder %s25, 0
      %p52 = por %p50, %p51
      %s54 = sadd.s32 %s53, 1
      %p57 = scmp.eq.s32.totalorder %s19, 1
      %p58 = scmp.ne.s32.totalorder %s53, %s55
      %p59 = scmp.eq.s32.totalorder %s19, 0
      %p60 = por %p58, %p59
      %p61 = scmp.ne.s32.totalorder %s53, %s55
      %p62 = scmp.eq.s32.totalorder %s24, 1
      %p63 = por %p61, %p62
      %p64 = scmp.ne.s32.totalorder %s55, %s56
      %p65 = scmp.eq.s32.totalorder %s24, 0
      %p66 = por %p64, %p65
      %p67 = scmp.ne.s32.totalorder %s55, %s56
      %p68 = scmp.eq.s32.totalorder %s25, 1
      %p69 = por %p67, %p68
      %p71 = scmp.ne.s32.totalorder %s56, %s70
      %p72 = scmp.eq.s32.totalorder %s25, 0
      %p73 = por %p71, %p72
      %s75 = sadd.s32 %s74, 1
      %p78 = scmp.eq.s32.totalorder %s19, 1
      %p79 = scmp.ne.s32.totalorder %s74, %s76
      %p80 = scmp.eq.s32.totalorder %s19, 0
      %p81 = por %p79, %p80
      %p82 = scmp.ne.s32.totalorder %s74, %s76
      %p83 = scmp.eq.s32.totalorder %s24, 1
      %p84 = por %p82, %p83
      %p85 = scmp.ne.s32.totalorder %s76, %s77
      %p86 = scmp.eq.s32.totalorder %s24, 0
      %p87 = por %p85, %p86
      %p88 = scmp.ne.s32.totalorder %s76, %s77
      %p89 = scmp.eq.s32.totalorder %s25, 1
      %p90 = por %p88, %p89
      %p92 = scmp.ne.s32.totalorder %s77, %s91
      %p93 = scmp.eq.s32.totalorder %s25, 0
      %p94 = por %p92, %p93
      %s96 = sadd.s32 %s95, 1
      %p99 = scmp.eq.s32.totalorder %s19, 1
      %p100 = scmp.ne.s32.totalorder %s95, %s97
      %p101 = scmp.eq.s32.totalorder %s19, 0
      %p102 = por %p100, %p101
      %p103 = scmp.ne.s32.totalorder %s95, %s97
      %p104 = scmp.eq.s32.totalorder %s24, 1
      %p105 = por %p103, %p104
      %p106 = scmp.ne.s32.totalorder %s97, %s98
      %p107 = scmp.eq.s32.totalorder %s24, 0
      %p108 = por %p106, %p107
      %p109 = scmp.ne.s32.totalorder %s97, %s98
      %p110 = scmp.eq.s32.totalorder %s25, 1
      %p111 = por %p109, %p110
      %p113 = scmp.ne.s32.totalorder %s98, %s112
      %p114 = scmp.eq.s32.totalorder %s25, 0
      %p115 = por %p113, %p114
      %s117 = sadd.s32 %s116, 1
      %p120 = scmp.eq.s32.totalorder %s19, 1
      %p121 = scmp.ne.s32.totalorder %s116, %s118
      %p122 = scmp.eq.s32.totalorder %s19, 0
      %p123 = por %p121, %p122
      %p124 = scmp.ne.s32.totalorder %s116, %s118
      %p125 = scmp.eq.s32.totalorder %s24, 1
      %p126 = por %p124, %p125
      %p127 = scmp.ne.s32.totalorder %s118, %s119
      %p128 = scmp.eq.s32.totalorder %s24, 0
      %p129 = por %p127, %p128
      %p130 = scmp.ne.s32.totalorder %s118, %s119
      %p131 = scmp.eq.s32.totalorder %s25, 1
      %p132 = por %p130, %p131
      %p134 = scmp.ne.s32.totalorder %s119, %s133
      %p135 = scmp.eq.s32.totalorder %s25, 0
      %p136 = por %p134, %p135
      %s138 = sadd.s32 %s137, 1
      %p141 = scmp.eq.s32.totalorder %s19, 1
      %p142 = scmp.ne.s32.totalorder %s137, %s139
      %p143 = scmp.eq.s32.totalorder %s19, 0
      %p144 = por %p142, %p143
      %p145 = scmp.ne.s32.totalorder %s137, %s139
      %p146 = scmp.eq.s32.totalorder %s24, 1
      %p147 = por %p145, %p146
      %p148 = scmp.ne.s32.totalorder %s139, %s140
      %p149 = scmp.eq.s32.totalorder %s24, 0
      %p150 = por %p148, %p149
      %p151 = scmp.ne.s32.totalorder %s139, %s140
      %p152 = scmp.eq.s32.totalorder %s25, 1
      %p153 = por %p151, %p152
      %p155 = scmp.ne.s32.totalorder %s140, %s154
      %p156 = scmp.eq.s32.totalorder %s25, 0
      %p157 = por %p155, %p156
      %s159 = sadd.s32 %s158, 1
      %p162 = scmp.eq.s32.totalorder %s19, 1
      %p163 = scmp.ne.s32.totalorder %s158, %s160
      %p164 = scmp.eq.s32.totalorder %s19, 0
      %p165 = por %p163, %p164
      %p166 = scmp.ne.s32.totalorder %s158, %s160
      %p167 = scmp.eq.s32.totalorder %s24, 1
      %p168 = por %p166, %p167
      %p169 = scmp.ne.s32.totalorder %s160, %s161
      %p170 = scmp.eq.s32.totalorder %s24, 0
      %p171 = por %p169, %p170
      %p172 = scmp.ne.s32.totalorder %s160, %s161
      %p173 = scmp.eq.s32.totalorder %s25, 1
      %p174 = por %p172, %p173
      %p176 = scmp.ne.s32.totalorder %s161, %s175
      %p177 = scmp.eq.s32.totalorder %s25, 0
      %p178 = por %p176, %p177
      %s180 = sadd.s32 %s179, 1
      %p183 = scmp.eq.s32.totalorder %s19, 1
      %p184 = scmp.ne.s32.totalorder %s179, %s181
      %p185 = scmp.eq.s32.totalorder %s19, 0
      %p186 = por %p184, %p185
      %p187 = scmp.ne.s32.totalorder %s179, %s181
      %p188 = scmp.eq.s32.totalorder %s24, 1
      %p189 = por %p187, %p188
      %p190 = scmp.ne.s32.totalorder %s181, %s182
      %p191 = scmp.eq.s32.totalorder %s24, 0
      %p192 = por %p190, %p191
      %p193 = scmp.ne.s32.totalorder %s181, %s182
      %p194 = scmp.eq.s32.totalorder %s25, 1
      %p195 = por %p193, %p194
      %p197 = scmp.ne.s32.totalorder %s182, %s196
      %p198 = scmp.eq.s32.totalorder %s25, 0
      %p199 = por %p197, %p198
      %s201 = sadd.s32 %s200, 1
      %p204 = scmp.eq.s32.totalorder %s19, 1
      %p205 = scmp.ne.s32.totalorder %s200, %s202
      %p206 = scmp.eq.s32.totalorder %s19, 0
      %p207 = por %p205, %p206
      %p208 = scmp.ne.s32.totalorder %s200, %s202
      %p209 = scmp.eq.s32.totalorder %s24, 1
      %p210 = por %p208, %p209
      %p211 = scmp.ne.s32.totalorder %s202, %s203
      %p212 = scmp.eq.s32.totalorder %s24, 0
      %p213 = por %p211, %p212
      %p214 = scmp.ne.s32.totalorder %s202, %s203
      %p215 = scmp.eq.s32.totalorder %s25, 1
      %p216 = por %p214, %p215
      %p218 = scmp.ne.s32.totalorder %s203, %s217
      %p219 = scmp.eq.s32.totalorder %s25, 0
      %p220 = por %p218, %p219
      %s222 = sadd.s32 %s221, 1
      %p225 = scmp.eq.s32.totalorder %s19, 1
      %p226 = scmp.ne.s32.totalorder %s221, %s223
      %p227 = scmp.eq.s32.totalorder %s19, 0
      %p228 = por %p226, %p227
      %p229 = scmp.ne.s32.totalorder %s221, %s223
      %p230 = scmp.eq.s32.totalorder %s24, 1
      %p231 = por %p229, %p230
      %p232 = scmp.ne.s32.totalorder %s223, %s224
      %p233 = scmp.eq.s32.totalorder %s24, 0
      %p234 = por %p232, %p233
      %p235 = scmp.ne.s32.totalorder %s223, %s224
      %p236 = scmp.eq.s32.totalorder %s25, 1
      %p237 = por %p235, %p236
      %p239 = scmp.ne.s32.totalorder %s224, %s238
      %p240 = scmp.eq.s32.totalorder %s25, 0
      %p241 = por %p239, %p240
      %s242 = ssub.s32 %s19, %s26
      %p243 = scmp.eq.s32.totalorder %s242, 0
      %s245 = sadd.s32 %s244, 1
      %s246 = scalar_select %p243, %s244, %s245
      %p249 = pneg %p243
      %p250 = scmp.eq.s32.totalorder %s19, 1
      %p251 = por %p249, %p250
      %p252 = scmp.ne.s32.totalorder %s244, %s247
      %p253 = scmp.eq.s32.totalorder %s19, 0
      %p254 = por %p252, %p253
      %p255 = scmp.ne.s32.totalorder %s244, %s247
      %p256 = scmp.eq.s32.totalorder %s24, 1
      %p257 = por %p255, %p256
      %p258 = scmp.ne.s32.totalorder %s247, %s248
      %p259 = scmp.eq.s32.totalorder %s24, 0
      %p260 = por %p258, %p259
      %p261 = scmp.ne.s32.totalorder %s247, %s248
      %p262 = scmp.eq.s32.totalorder %s25, 1
      %p263 = por %p261, %p262
      %p265 = scmp.ne.s32.totalorder %s248, %s264
      %p266 = scmp.eq.s32.totalorder %s25, 0
      %p267 = por %p265, %p266
      %p268 = scmp.le.s32.totalorder 1, %s19
      %p269 = scmp.lt.s32.totalorder %s19, 3
      %p270 = pnand %p268, %p269
      %p271 = pneg %p270
      // Predicated region
      $region9: #{tpu_custom_call.1} parent=5 // pred_check
        _
      $region10: #{tpu_custom_call.1} parent=5 // pred_check_branch
        %273 = sbr.rel (%p270) target = $region12
      $region11: #{tpu_custom_call.1} parent=5 // pred_region
        %s274 = ssub.s32 %s19, 1
        // Predicated region
        $region13: #{tpu_custom_call.1} parent=11 // pred_check
          %p275 = pneg %p66
        $region14: #{tpu_custom_call.1} parent=11 // pred_check_branch
          %277 = sbr.rel (%p275) target = $region16
        $region15: #{tpu_custom_call.1} parent=11 // pred_region
          _
        $region16: #{tpu_custom_call.1} parent=11 // pred_fallthru
          _
        // Predicated region
        $region17: #{tpu_custom_call.1} parent=11 // pred_check
          %p278 = pneg %p87
        $region18: #{tpu_custom_call.1} parent=11 // pred_check_branch
          %280 = sbr.rel (%p278) target = $region20
        $region19: #{tpu_custom_call.1} parent=11 // pred_region
          _
        $region20: #{tpu_custom_call.1} parent=11 // pred_fallthru
          _
        // Predicated region
        $region21: #{tpu_custom_call.1} parent=11 // pred_check
          %p281 = pneg %p108
        $region22: #{tpu_custom_call.1} parent=11 // pred_check_branch
          %283 = sbr.rel (%p281) target = $region24
        $region23: #{tpu_custom_call.1} parent=11 // pred_region
          _
        $region24: #{tpu_custom_call.1} parent=11 // pred_fallthru
          _
        // Predicated region
        $region25: #{tpu_custom_call.1} parent=11 // pred_check
          %p284 = pneg %p129
        $region26: #{tpu_custom_call.1} parent=11 // pred_check_branch
          %286 = sbr.rel (%p284) target = $region28
        $region27: #{tpu_custom_call.1} parent=11 // pred_region
          _
        $region28: #{tpu_custom_call.1} parent=11 // pred_fallthru
          _
        // Predicated region
        $region29: #{tpu_custom_call.1} parent=11 // pred_check
          %p287 = pneg %p150
        $region30: #{tpu_custom_call.1} parent=11 // pred_check_branch
          %289 = sbr.rel (%p287) target = $region32
        $region31: #{tpu_custom_call.1} parent=11 // pred_region
          _
        $region32: #{tpu_custom_call.1} parent=11 // pred_fallthru
          _
        // Predicated region
        $region33: #{tpu_custom_call.1} parent=11 // pred_check
          %p290 = pneg %p171
        $region34: #{tpu_custom_call.1} parent=11 // pred_check_branch
          %292 = sbr.rel (%p290) target = $region36
        $region35: #{tpu_custom_call.1} parent=11 // pred_region
          _
        $region36: #{tpu_custom_call.1} parent=11 // pred_fallthru
          _
        // Predicated region
        $region37: #{tpu_custom_call.1} parent=11 // pred_check
          %p293 = pneg %p192
        $region38: #{tpu_custom_call.1} parent=11 // pred_check_branch
          %295 = sbr.rel (%p293) target = $region40
        $region39: #{tpu_custom_call.1} parent=11 // pred_region
          _
        $region40: #{tpu_custom_call.1} parent=11 // pred_fallthru
          _
        // Predicated region
        $region41: #{tpu_custom_call.1} parent=11 // pred_check
          %p296 = pneg %p213
        $region42: #{tpu_custom_call.1} parent=11 // pred_check_branch
          %298 = sbr.rel (%p296) target = $region44
        $region43: #{tpu_custom_call.1} parent=11 // pred_region
          _
        $region44: #{tpu_custom_call.1} parent=11 // pred_fallthru
          _
        // Predicated region
        $region45: #{tpu_custom_call.1} parent=11 // pred_check
          %p299 = pneg %p234
        $region46: #{tpu_custom_call.1} parent=11 // pred_check_branch
          %301 = sbr.rel (%p299) target = $region48
        $region47: #{tpu_custom_call.1} parent=11 // pred_region
          _
        $region48: #{tpu_custom_call.1} parent=11 // pred_fallthru
          _
      $region12: #{tpu_custom_call.1} parent=5 // pred_fallthru
        _
      %p302 = scmp.lt.s32.totalorder %s19, 2
      // Predicated region
      $region49: #{tpu_custom_call.1} parent=5 // pred_check
        %p303 = pneg %p302
      $region50: #{tpu_custom_call.1} parent=5 // pred_check_branch
        %305 = sbr.rel (%p303) target = $region52
      $region51: #{tpu_custom_call.1} parent=5 // pred_region
        // Predicated region
        $region53: #{tpu_custom_call.1} parent=51 // pred_check
          %p306 = pneg %p39
        $region54: #{tpu_custom_call.1} parent=51 // pred_check_branch
          %308 = sbr.rel (%p306) target = $region56
        $region55: #{tpu_custom_call.1} parent=51 // pred_region
          %p309 = scmp.lt.s32.totalorder %s19, 1
          %s310 = scalar_select %p309, %s19, 1
          %s311 = smul.addr %s310, 8
          %s312 = scalar_lea.vmem %s0, %s311
        $region56: #{tpu_custom_call.1} parent=51 // pred_fallthru
          _
      $region52: #{tpu_custom_call.1} parent=5 // pred_fallthru
        _
      %p313 = scmp.le.s32.totalorder 1, %s19
      %p314 = scmp.lt.s32.totalorder %s19, 3
      %p315 = pnand %p313, %p314
      %p316 = pneg %p315
      // Predicated region
      $region57: #{tpu_custom_call.1} parent=5 // pred_check
        _
      $region58: #{tpu_custom_call.1} parent=5 // pred_check_branch
        %318 = sbr.rel (%p315) target = $region60
      $region59: #{tpu_custom_call.1} parent=5 // pred_region
        %s319 = ssub.s32 %s19, 1
        %p320 = scmp.lt.s32.totalorder %s24, 1
        %s321 = scalar_select %p320, %s24, 1
        %s322 = smul.addr %s321, 8
        %s323 = scalar_lea.vmem %s0, %s322
        %p324 = pneg %p45
        %p325 = pneg %p42
        %p326 = pneg %p66
        %p327 = pneg %p63
        %p328 = pneg %p87
        %p329 = pneg %p84
        %p330 = pneg %p108
        %p331 = pneg %p105
        %p332 = pneg %p129
        %p333 = pneg %p126
        %p334 = pneg %p150
        %p335 = pneg %p147
        %p336 = pneg %p171
        %p337 = pneg %p168
        %p338 = pneg %p192
        %p339 = pneg %p189
        %p340 = pneg %p213
        %p341 = pneg %p210
        %p342 = pneg %p234
        %p343 = pneg %p231
        %p344 = pneg %p260
        %p345 = pneg %p257
        %s346 = sand.u32 %s247, 1
        %s347 = scalar_lea.sflag [#allocation3], %s346
        %s348 = sand.u32 %s247, 1
        %s349 = smul.addr %s348, 8
        %s350 = scalar_lea.vmem [#allocation2], %s349
        %p351 = scmp.lt.s32.totalorder %s24, 1
        %s352 = scalar_select %p351, %s24, 1
        %s353 = smul.addr %s352, 8
        %s354 = scalar_lea.vmem %s0, %s353
        %v355 = vld [vmem:[%s1] sm:$0xff]
        %v356 = vld [vmem:[%s354] sm:$0xff]
        %v357 = vld [vmem:[%s2] sm:$0xff]
        %v358 = vld [vmem:[%s2 + $0x8] sm:$0xff]
        %v359 = vld [vmem:[%s2 + $0x10] sm:$0xff]
        %v360 = vld [vmem:[%s2 + $0x18] sm:$0xff]
        %v361 = vld [vmem:[%s3] sm:$0x1]
        %v363 = vperm.slane %v361, 0
        %vm365 = vcmask 261120
        %v367 = vsel %vm365, %v356, 0
        %369 = vmatpush.msra.mxu0 0.0
        %370 = vmatpush.msra.mxu0 0.0
        %371 = vmatpush.msra.mxu0 0.0
        %372 = vmatpush.msra.mxu0 0.0
        %373 = vmatpush.msra.mxu0 0.0
        %374 = vmatpush.msra.mxu0 0.0
        %375 = vmatpush.msra.mxu0 0.0
        %376 = vmatpush.msra.mxu0 0.0
        %377 = vmatpush.msra.mxu0 0.0
        %378 = vmatpush.msra.mxu0 0.0
        %379 = vmatpush.msra.mxu0 0.0
        %380 = vmatpush.msra.mxu0 0.0
        %381 = vmatpush.msra.mxu0 %v360
        %382 = vmatpush.msra.mxu0 %v359
        %383 = vmatpush.msra.mxu0 %v358
        %384 = vmatpush.msra.mxu0 %v357
        %385 = vmatmul.f32.gmra.mxu0 %v367
        %v386 = vpop.f32.mrf.mxu0
        %v387 = vadd.f32 %v363, %v386
        %388 = vdwg.mxu0
        %vm389 = vcmask 64512
        %v391 = vsel %vm389, %v355, 0
        %393 = vmatpush.msra.mxu0 0.0
        %394 = vmatpush.msra.mxu0 0.0
        %395 = vmatpush.msra.mxu0 0.0
        %396 = vmatpush.msra.mxu0 0.0
        %397 = vmatpush.msra.mxu0 0.0
        %398 = vmatpush.msra.mxu0 0.0
        %399 = vmatpush.msra.mxu0 0.0
        %400 = vmatpush.msra.mxu0 0.0
        %401 = vmatpush.msra.mxu0 0.0
        %402 = vmatpush.msra.mxu0 0.0
        %403 = vmatpush.msra.mxu0 0.0
        %404 = vmatpush.msra.mxu0 0.0
        %405 = vmatpush.msra.mxu0 0.0
        %406 = vmatpush.msra.mxu0 0.0
        %407 = vmatpush.msra.mxu0 0.0
        %408 = vmatpush.msra.mxu0 %v387
        %409 = vmatmul.f32.gmra.mxu0 %v391
        %v410 = vpop.f32.mrf.mxu0
        %v411 = vadd.f32 0.0, %v410
        %412 = vdwg.mxu0
        %v413 = vld [vmem:[%s4] sm:$0xff]
        %v414 = vld [vmem:[%s4 + $0x8] sm:$0xff]
        %v415 = vld [vmem:[%s5] sm:$0x1]
        %v417 = vperm.slane %v415, 0
        %vm419 = vcmask 130048
        %v421 = vsel %vm419, %v411, 0
        %423 = vmatpush.msra.mxu0 0.0
        %424 = vmatpush.msra.mxu0 0.0
        %425 = vmatpush.msra.mxu0 0.0
        %426 = vmatpush.msra.mxu0 0.0
        %427 = vmatpush.msra.mxu0 0.0
        %428 = vmatpush.msra.mxu0 0.0
        %429 = vmatpush.msra.mxu0 0.0
        %430 = vmatpush.msra.mxu0 0.0
        %431 = vmatpush.msra.mxu0 0.0
        %432 = vmatpush.msra.mxu0 0.0
        %433 = vmatpush.msra.mxu0 0.0
        %434 = vmatpush.msra.mxu0 0.0
        %435 = vmatpush.msra.mxu0 0.0
        %436 = vmatpush.msra.mxu0 0.0
        %437 = vmatpush.msra.mxu0 %v414
        %438 = vmatpush.msra.mxu0 %v413
        %439 = vmatmul.f32.gmra.mxu0 %v421
        %v440 = vpop.f32.mrf.mxu0
        %v441 = vadd.f32 %v417, %v440
        %442 = vdwg.mxu0
        %v443 = vmax.f32 %v441, 0.0
        %v444 = vld [vmem:[%s6] sm:$0xff]
        %v445 = vld [vmem:[%s6 + $0x8] sm:$0xff]
        %v446 = vld [vmem:[%s6 + $0x10] sm:$0xff]
        %v447 = vld [vmem:[%s6 + $0x18] sm:$0xff]
        %v449 = vsel %vm365, %v443, 0
        %451 = vmatpush.msra.mxu0 0.0
        %452 = vmatpush.msra.mxu0 0.0
        %453 = vmatpush.msra.mxu0 0.0
        %454 = vmatpush.msra.mxu0 0.0
        %455 = vmatpush.msra.mxu0 0.0
        %456 = vmatpush.msra.mxu0 0.0
        %457 = vmatpush.msra.mxu0 0.0
        %458 = vmatpush.msra.mxu0 0.0
        %459 = vmatpush.msra.mxu0 0.0
        %460 = vmatpush.msra.mxu0 0.0
        %461 = vmatpush.msra.mxu0 0.0
        %462 = vmatpush.msra.mxu0 0.0
        %463 = vmatpush.msra.mxu0 %v447
        %464 = vmatpush.msra.mxu0 %v446
        %465 = vmatpush.msra.mxu0 %v445
        %466 = vmatpush.msra.mxu0 %v444
        %467 = vmatmul.f32.gmra.mxu0 %v449
        %v468 = vpop.f32.mrf.mxu0
        %v469 = vadd.f32 0.0, %v468
        %470 = vdwg.mxu0
        %v471 = vld [vmem:[%s7] sm:$0x1]
        %v473 = vperm.slane %v471, 0
        %475 = vmatpush.msra.mxu0 0.0
        %476 = vmatpush.msra.mxu0 0.0
        %477 = vmatpush.msra.mxu0 0.0
        %478 = vmatpush.msra.mxu0 0.0
        %479 = vmatpush.msra.mxu0 0.0
        %480 = vmatpush.msra.mxu0 0.0
        %481 = vmatpush.msra.mxu0 0.0
        %482 = vmatpush.msra.mxu0 0.0
        %483 = vmatpush.msra.mxu0 0.0
        %484 = vmatpush.msra.mxu0 0.0
        %485 = vmatpush.msra.mxu0 0.0
        %486 = vmatpush.msra.mxu0 0.0
        %487 = vmatpush.msra.mxu0 0.0
        %488 = vmatpush.msra.mxu0 0.0
        %489 = vmatpush.msra.mxu0 0.0
        %490 = vmatpush.msra.mxu0 %v469
        %491 = vmatmul.f32.gmra.mxu0 %v391
        %v492 = vpop.f32.mrf.mxu0
        %v493 = vadd.f32 %v473, %v492
        %494 = vdwg.mxu0
        %v495 = vmax.f32 %v493, 0.0
        %v496 = vld [vmem:[%s8] sm:$0xff]
        %v497 = vld [vmem:[%s8 + $0x8] sm:$0xff]
        %v498 = vld [vmem:[%s8 + $0x10] sm:$0xff]
        %v499 = vld [vmem:[%s8 + $0x18] sm:$0xff]
        %v501 = vsel %vm365, %v495, 0
        %503 = vmatpush.msra.mxu0 0.0
        %504 = vmatpush.msra.mxu0 0.0
        %505 = vmatpush.msra.mxu0 0.0
        %506 = vmatpush.msra.mxu0 0.0
        %507 = vmatpush.msra.mxu0 0.0
        %508 = vmatpush.msra.mxu0 0.0
        %509 = vmatpush.msra.mxu0 0.0
        %510 = vmatpush.msra.mxu0 0.0
        %511 = vmatpush.msra.mxu0 0.0
        %512 = vmatpush.msra.mxu0 0.0
        %513 = vmatpush.msra.mxu0 0.0
        %514 = vmatpush.msra.mxu0 0.0
        %515 = vmatpush.msra.mxu0 %v499
        %516 = vmatpush.msra.mxu0 %v498
        %517 = vmatpush.msra.mxu0 %v497
        %518 = vmatpush.msra.mxu0 %v496
        %519 = vmatmul.f32.gmra.mxu0 %v501
        %v520 = vpop.f32.mrf.mxu0
        %v521 = vadd.f32 0.0, %v520
        %522 = vdwg.mxu0
        %v523 = vld [vmem:[%s9] sm:$0x1]
        %v525 = vperm.slane %v523, 0
        %527 = vmatpush.msra.mxu0 0.0
        %528 = vmatpush.msra.mxu0 0.0
        %529 = vmatpush.msra.mxu0 0.0
        %530 = vmatpush.msra.mxu0 0.0
        %531 = vmatpush.msra.mxu0 0.0
        %532 = vmatpush.msra.mxu0 0.0
        %533 = vmatpush.msra.mxu0 0.0
        %534 = vmatpush.msra.mxu0 0.0
        %535 = vmatpush.msra.mxu0 0.0
        %536 = vmatpush.msra.mxu0 0.0
        %537 = vmatpush.msra.mxu0 0.0
        %538 = vmatpush.msra.mxu0 0.0
        %539 = vmatpush.msra.mxu0 0.0
        %540 = vmatpush.msra.mxu0 0.0
        %541 = vmatpush.msra.mxu0 0.0
        %542 = vmatpush.msra.mxu0 %v521
        %543 = vmatmul.f32.gmra.mxu0 %v391
        %v544 = vpop.f32.mrf.mxu0
        %v545 = vadd.f32 %v525, %v544
        %546 = vdwg.mxu0
        %v547 = vmax.f32 %v545, 0.0
        %548 = vst.msk [vmem:[%s350] sm:$0xff] %vm419, %v547
        %550 = vrot.lane.b32.xlu0 %v387, 16
        %v551 = vpop.permute.xlu0 %550
        %vm553 = vcmask 261248
        %554 = vst.msk [vmem:[%s350] sm:$0xff] %vm553, %v551
        %s555 = sand.u32 %s247, 1
        %s556 = scalar_lea.sflag [#allocation3], %s555
        %s557 = sand.u32 %s247, 1
        %s558 = smul.addr %s557, 8
        %s559 = scalar_lea.vmem [#allocation2], %s558
        // Predicated region
        $region61: #{tpu_custom_call.1} parent=59 // pred_check
          %p560 = pneg %p257
        $region62: #{tpu_custom_call.1} parent=59 // pred_check_branch
          %562 = sbr.rel (%p560) target = $region64
        $region63: #{tpu_custom_call.1} parent=59 // pred_region
          %564 = vsyncadd %s556, 0
          %s565 = smul.addr %s24, 8
          %s566 = scalar_lea.hbm %s10, %s565
          %s568 = sshll.u32 %s559, 4
          %s569 = int_to_ptr.vmem [resolvable:$true] %s568
          %s570 = sshll.u32 %s566, 4
          %s571 = int_to_ptr.hbm [resolvable:$true] %s570
          %573 = dma.vmem_to_hbm [thread:$0]  %s569, 128, %s571, %s556
        $region64: #{tpu_custom_call.1} parent=59 // pred_fallthru
          _
      $region60: #{tpu_custom_call.1} parent=5 // pred_fallthru
        _
      %p574 = scmp.le.s32.totalorder 2, %s19
      // Predicated region
      $region65: #{tpu_custom_call.1} parent=5 // pred_check
        %p575 = pneg %p574
      $region66: #{tpu_custom_call.1} parent=5 // pred_check_branch
        %577 = sbr.rel (%p575) target = $region68
      $region67: #{tpu_custom_call.1} parent=5 // pred_region
        %s578 = ssub.s32 %s19, 2
        // Predicated region
        $region69: #{tpu_custom_call.1} parent=67 // pred_check
          %p579 = pneg %p263
        $region70: #{tpu_custom_call.1} parent=67 // pred_check_branch
          %581 = sbr.rel (%p579) target = $region72
        $region71: #{tpu_custom_call.1} parent=67 // pred_region
          %s582 = sand.u32 %s248, 1
          %s583 = scalar_lea.sflag [#allocation3], %s582
          %s584 = sand.u32 %s248, 1
          %s585 = smul.addr %s584, 8
          %s586 = scalar_lea.vmem [#allocation2], %s585
          %588 = dma.done %s583, 128
        $region72: #{tpu_custom_call.1} parent=67 // pred_fallthru
          _
      $region68: #{tpu_custom_call.1} parent=5 // pred_fallthru
        _
    $region6: #{tpu_custom_call.1} parent=1 // loop_footer
      %s23 = sadd.s32 1, %s19
    $region7: #{tpu_custom_call.1} parent=1 // loop_footer_branch
      %18 = sbr.rel target = $region3
    $region8: #{tpu_custom_call.1} parent=1 // loop_exit
      _
    %589 = vsyncpa [#allocation3], 1
    %s590 = scalar_lea.sflag [#allocation3], 1
    %591 = vsyncpa %s590, 1

</llo_original>
